<compile_context>
chip_gen: v5e
topology: v5e:2x2
jax: 0.10.0
libtpu: 0.0.40
codegen_flags: <defaults>
</compile_context>

<pallas_src>
import jax
import jax.numpy as jnp
from jax.experimental import pallas as pl
from jax.experimental.pallas import tpu as pltpu

BN_EPS = 1e-5
LANE = 128          # lane width: last-dim / MXU-K alignment target
SUBLANE_BF16 = 16   # bf16 sublane packing: batch-dim alignment target


def _round_up(n, m):
    return ((n + m - 1) // m) * m


def _make_kernel(b_real, b_pad):
    """Kernel closure; the real batch size is a trace-time constant, so BN's
    1/B and the pad-row mask need no scalar ref."""
    inv_b = 1.0 / float(b_real)
    need_mask = b_pad != b_real

    def kernel(x_ref, w1_ref, g1_ref, be1_ref, w2_ref, g2_ref, be2_ref, o_ref):
        if need_mask:
            row_mask = (jax.lax.broadcasted_iota(jnp.int32, (b_pad, 1), 0)
                        < b_real)

        # fc1 (bias dropped: it cancels exactly against the training-mode BN
        # that follows).  bf16 operands on the MXU, f32 accumulation.
        h = jnp.dot(x_ref[...].astype(jnp.bfloat16), w1_ref[...],
                    preferred_element_type=jnp.float32)

        # bn1 (training mode, biased variance).  Two-pass / centered stats:
        # subtract the batch mean before squaring (no E[h^2]-E[h]^2
        # cancellation).  Pad rows of h are exactly zero (zero x rows, no
        # bias), so the mean is correct with inv_b = 1/B_real; centered pad
        # rows are masked out of the variance.
        m1 = jnp.sum(h, axis=0, keepdims=True) * inv_b
        hc = h - m1
        if need_mask:
            hc = jnp.where(row_mask, hc, 0.0)
        v1 = jnp.sum(hc * hc, axis=0, keepdims=True) * inv_b
        scale1 = g1_ref[...] * jax.lax.rsqrt(v1 + BN_EPS)

        # Fused affine + ReLU on the centered values; re-mask pad rows so the
        # per-channel shift (beta) cannot leak into bn2's statistics.
        a = jnp.maximum(hc * scale1 + be1_ref[...], 0.0)
        if need_mask:
            a = jnp.where(row_mask, a, 0.0)

        # fc2 (no bias): bf16 operands, f32 accumulation.
        z = jnp.dot(a.astype(jnp.bfloat16), w2_ref[...],
                    preferred_element_type=jnp.float32)

        # bn2 (training mode), same two-pass scheme.  Pad rows of z are zero.
        m2 = jnp.sum(z, axis=0, keepdims=True) * inv_b
        zc = z - m2
        zc_v = jnp.where(row_mask, zc, 0.0) if need_mask else zc
        v2 = jnp.sum(zc_v * zc_v, axis=0, keepdims=True) * inv_b
        scale2 = g2_ref[...] * jax.lax.rsqrt(v2 + BN_EPS)
        o_ref[...] = (zc * scale2 + be2_ref[...]).astype(o_ref.dtype)

    return kernel


def prepare_kernel_params(params):
    """One-time packing: transpose weights to [in, out], zero-pad every dim
    the kernel touches (K = ch, ch1, ch2) to multiples of 128, cast to bf16.
    fc1's bias is intentionally NOT packed (it cancels with bn1)."""
    fc1_w = params["fc1_w"]            # [ch1, ch]  (torch layout)
    fc2_w = params["fc2_w"]            # [ch2, ch1]
    ch1, ch = fc1_w.shape
    ch2 = fc2_w.shape[0]
    chp = _round_up(ch, LANE)
    ch1p = _round_up(ch1, LANE)
    ch2p = _round_up(ch2, LANE)

    w1 = jnp.zeros((chp, ch1p), jnp.bfloat16).at[:ch, :ch1].set(
        fc1_w.T.astype(jnp.bfloat16))
    w2 = jnp.zeros((ch1p, ch2p), jnp.bfloat16).at[:ch1, :ch2].set(
        fc2_w.T.astype(jnp.bfloat16))

    def pad_row(v, n, fill):
        return jnp.full((1, n), fill, jnp.float32).at[0, :v.shape[0]].set(
            v.astype(jnp.float32))

    return {
        "w1": w1,
        "g1": pad_row(params["bn1_g"], ch1p, 1.0),
        "be1": pad_row(params["bn1_b"], ch1p, 0.0),
        "w2": w2,
        "g2": pad_row(params["bn2_g"], ch2p, 1.0),
        "be2": pad_row(params["bn2_b"], ch2p, 0.0),
        "in_features": ch,
        "out_features": ch2,
    }


def _vmem_budget_bytes():
    """Per-generation VMEM cap: ~48 MiB on 64-MiB parts (v7x per-TC), up to
    ~112 MiB on 128-MiB parts (v5e/v6e)."""
    try:
        cap = int(getattr(pltpu.get_tpu_info(), "vmem_capacity_bytes",
                          64 << 20))
    except Exception:
        cap = 64 << 20
    if cap <= (64 << 20):
        return 48 << 20
    return min(cap - (16 << 20), 112 << 20)


def proj_head_forward(x, kp):
    """x: [B, ch] float32 (bf16 also accepted). kp: prepare_kernel_params()."""
    B, ch = x.shape
    assert ch == kp["in_features"]
    chp, ch1p = kp["w1"].shape
    ch2p = kp["w2"].shape[1]
    ch2 = kp["out_features"]
    Bp = _round_up(max(B, 1), SUBLANE_BF16)
    out_dtype = jnp.float32

    if Bp != B or chp != ch:
        # Single staging op: zero-pad the batch (sublane) and feature (lane /
        # MXU-K) dims AND cast to bf16 in the same op -> dense vld, full-width
        # MXU feed, half the HBM bytes for x.
        xk = (jnp.zeros((Bp, chp), jnp.bfloat16)
              .at[:B, :ch].set(x.astype(jnp.bfloat16)))
    else:
        xk = x   # already aligned; the bf16 cast stays in-kernel (no extra op)

    names = ("w1", "g1", "be1", "w2", "g2", "be2")
    bytes_in = xk.size * xk.dtype.itemsize + sum(
        kp[k].size * kp[k].dtype.itemsize for k in names)
    bytes_out = Bp * ch2p * jnp.dtype(out_dtype).itemsize
    cost = pl.CostEstimate(
        flops=2 * Bp * chp * ch1p + 2 * Bp * ch1p * ch2p,
        transcendentals=ch1p + ch2p,
        bytes_accessed=bytes_in + bytes_out,
    )

    # Gridless call: full-batch BN statistics require everything resident.
    # Residency counts the bf16 x, weights, f32 h / centered h / relu output
    # (+ its bf16 copy), f32 z / centered z, and the output tile.
    resident = (bytes_in + bytes_out
                + Bp * ch1p * (4 + 4 + 4 + 2)
                + Bp * ch2p * (4 + 4))
    budget = _vmem_budget_bytes()
    vmem_limit = int(min(budget, max(32 << 20, 2 * resident)))
    # TODO(synk): if 2*resident exceeds `budget` (very large B), switch to a
    # B-tiled multi-pass path (pipelined row tiles + sum/sumsq accumulators via
    # pl.when init/finalize) instead of clamping the limit.

    vmem = lambda: pl.BlockSpec(memory_space=pltpu.VMEM)
    out_padded = pl.pallas_call(
        _make_kernel(B, Bp),
        out_shape=jax.ShapeDtypeStruct((Bp, ch2p), out_dtype),
        in_specs=[vmem() for _ in range(7)],
        out_specs=vmem(),
        compiler_params=pltpu.CompilerParams(vmem_limit_bytes=vmem_limit),
        cost_estimate=cost,
    )(xk, kp["w1"], kp["g1"], kp["be1"], kp["w2"], kp["g2"], kp["be2"])

    # Only pay the slice (extra HBM traffic) when padding forces it.
    if Bp != B or ch2p != ch2:
        return out_padded[:B, :ch2]
    return out_padded


def init_params(key, ch):
    """Deterministic synthetic init (shapes match nn.Linear / nn.BatchNorm1d)."""
    ch1, ch2 = ch // 2, ch // 4
    k1, k2, k3 = jax.random.split(key, 3)
    bound1 = 1.0 / jnp.sqrt(ch)
    bound2 = 1.0 / jnp.sqrt(ch1)
    return {
        "fc1_w": jax.random.uniform(k1, (ch1, ch), jnp.float32, -bound1, bound1),
        "fc1_b": jax.random.uniform(k2, (ch1,), jnp.float32, -bound1, bound1),
        "bn1_g": jnp.ones((ch1,), jnp.float32),
        "bn1_b": jnp.zeros((ch1,), jnp.float32),
        "fc2_w": jax.random.uniform(k3, (ch2, ch1), jnp.float32, -bound2, bound2),
        "bn2_g": jnp.ones((ch2,), jnp.float32),
        "bn2_b": jnp.zeros((ch2,), jnp.float32),
    }


def reference_forward(x, p):
    """Pure-JAX f32 reference matching the torch module in training mode
    (includes the fc1 bias, which the kernel provably cancels)."""
    h = x @ p["fc1_w"].T + p["fc1_b"]
    m = h.mean(0); v = ((h - m) ** 2).mean(0)
    h = (h - m) / jnp.sqrt(v + BN_EPS) * p["bn1_g"] + p["bn1_b"]
    h = jnp.maximum(h, 0.0)
    z = h @ p["fc2_w"].T
    m = z.mean(0); v = ((z - m) ** 2).mean(0)
    return (z - m) / jnp.sqrt(v + BN_EPS) * p["bn2_g"] + p["bn2_b"]


if __name__ == "__main__":
    key = jax.random.PRNGKey(0)
    kx, kparam = jax.random.split(key)

    B, ch = 8, 32                       # small shapes consistent with the module
    x = jax.random.normal(kx, (B, ch), jnp.float32)
    params = init_params(kparam, ch)
    kparams = prepare_kernel_params(params)   # one-time transpose/pad/bf16 pack

    out = jax.block_until_ready(proj_head_forward(x, kparams))
    ref = reference_forward(x, params)

    assert out.shape == (B, ch // 4)
    # bf16 MXU operands -> ~1e-3..1e-2 absolute error on unit-scale BN outputs.
    assert jnp.allclose(out, ref, atol=5e-2, rtol=5e-2), \
        float(jnp.max(jnp.abs(out - ref)))

    print("KERNEL_OK")
</pallas_src>

<mosaic_0001>
module attributes {stable_mosaic.version = 11 : i64} {
  func.func @kernel(%arg0: memref<16x128xbf16, #tpu.memory_space<vmem>>, %arg1: memref<128x128xbf16, #tpu.memory_space<vmem>>, %arg2: memref<1x128xf32, #tpu.memory_space<vmem>>, %arg3: memref<1x128xf32, #tpu.memory_space<vmem>>, %arg4: memref<128x128xbf16, #tpu.memory_space<vmem>>, %arg5: memref<1x128xf32, #tpu.memory_space<vmem>>, %arg6: memref<1x128xf32, #tpu.memory_space<vmem>>, %arg7: memref<16x128xf32, #tpu.memory_space<vmem>>) attributes {dimension_semantics = [], scalar_prefetch = 0 : i64, scratch_operands = 0 : i64, tpu.core_type = #tpu.core_type<tc>} {
    %0 = tpu.iota {dimensions = array<i32: 0>} : vector<16x1xi32>
    %c8_i32 = arith.constant 8 : i32
    %1 = vector.broadcast %c8_i32 : i32 to vector<16x1xi32>
    %2 = arith.cmpi slt, %0, %1 : vector<16x1xi32>
    %c0 = arith.constant 0 : index
    %c0_0 = arith.constant 0 : index
    %3 = vector.load %arg0[%c0, %c0_0] : memref<16x128xbf16, #tpu.memory_space<vmem>>, vector<16x128xbf16>
    %c0_1 = arith.constant 0 : index
    %c0_2 = arith.constant 0 : index
    %4 = vector.load %arg1[%c0_1, %c0_2] : memref<128x128xbf16, #tpu.memory_space<vmem>>, vector<128x128xbf16>
    %cst = arith.constant dense<0.000000e+00> : vector<16x128xf32>
    %5 = tpu.matmul %3, %4, %cst {dimension_numbers = #tpu.dot_dimension_numbers<[1], [0], [0], [1], [0, 0, 1, 1], [], []>} : vector<16x128xbf16>, vector<128x128xbf16>, vector<16x128xf32> -> vector<16x128xf32>
    %cst_3 = arith.constant dense<0.000000e+00> : vector<128xf32>
    %6 = vector.multi_reduction <add>, %5, %cst_3 [0] : vector<16x128xf32> to vector<128xf32>
    %7 = vector.shape_cast %6 : vector<128xf32> to vector<1x128xf32>
    %cst_4 = arith.constant 1.250000e-01 : f32
    %8 = vector.broadcast %cst_4 : f32 to vector<1x128xf32>
    %9 = arith.mulf %7, %8 : vector<1x128xf32>
    %10 = vector.broadcast %9 : vector<1x128xf32> to vector<16x128xf32>
    %11 = arith.subf %5, %10 : vector<16x128xf32>
    %cst_5 = arith.constant 0.000000e+00 : f32
    %12 = vector.shape_cast %2 : vector<16x1xi1> to vector<16x1xi1>
    %13 = vector.broadcast %12 : vector<16x1xi1> to vector<16x128xi1>
    %14 = vector.broadcast %cst_5 : f32 to vector<16x128xf32>
    %15 = arith.select %13, %11, %14 : vector<16x128xi1>, vector<16x128xf32>
    %16 = arith.mulf %15, %15 : vector<16x128xf32>
    %cst_6 = arith.constant dense<0.000000e+00> : vector<128xf32>
    %17 = vector.multi_reduction <add>, %16, %cst_6 [0] : vector<16x128xf32> to vector<128xf32>
    %18 = vector.shape_cast %17 : vector<128xf32> to vector<1x128xf32>
    %cst_7 = arith.constant 1.250000e-01 : f32
    %19 = vector.broadcast %cst_7 : f32 to vector<1x128xf32>
    %20 = arith.mulf %18, %19 : vector<1x128xf32>
    %c0_8 = arith.constant 0 : index
    %c0_9 = arith.constant 0 : index
    %21 = vector.load %arg2[%c0_8, %c0_9] : memref<1x128xf32, #tpu.memory_space<vmem>>, vector<1x128xf32>
    %cst_10 = arith.constant 9.99999974E-6 : f32
    %22 = vector.broadcast %cst_10 : f32 to vector<1x128xf32>
    %23 = arith.addf %20, %22 : vector<1x128xf32>
    %24 = math.rsqrt %23 : vector<1x128xf32>
    %25 = arith.mulf %21, %24 : vector<1x128xf32>
    %26 = vector.broadcast %25 : vector<1x128xf32> to vector<16x128xf32>
    %27 = arith.mulf %15, %26 : vector<16x128xf32>
    %c0_11 = arith.constant 0 : index
    %c0_12 = arith.constant 0 : index
    %28 = vector.load %arg3[%c0_11, %c0_12] : memref<1x128xf32, #tpu.memory_space<vmem>>, vector<1x128xf32>
    %29 = vector.broadcast %28 : vector<1x128xf32> to vector<16x128xf32>
    %30 = arith.addf %27, %29 : vector<16x128xf32>
    %cst_13 = arith.constant 0.000000e+00 : f32
    %31 = vector.broadcast %cst_13 : f32 to vector<16x128xf32>
    %32 = arith.maximumf %30, %31 : vector<16x128xf32>
    %cst_14 = arith.constant 0.000000e+00 : f32
    %33 = vector.shape_cast %2 : vector<16x1xi1> to vector<16x1xi1>
    %34 = vector.broadcast %33 : vector<16x1xi1> to vector<16x128xi1>
    %35 = vector.broadcast %cst_14 : f32 to vector<16x128xf32>
    %36 = arith.select %34, %32, %35 : vector<16x128xi1>, vector<16x128xf32>
    %37 = arith.truncf %36 : vector<16x128xf32> to vector<16x128xbf16>
    %c0_15 = arith.constant 0 : index
    %c0_16 = arith.constant 0 : index
    %38 = vector.load %arg4[%c0_15, %c0_16] : memref<128x128xbf16, #tpu.memory_space<vmem>>, vector<128x128xbf16>
    %cst_17 = arith.constant dense<0.000000e+00> : vector<16x128xf32>
    %39 = tpu.matmul %37, %38, %cst_17 {dimension_numbers = #tpu.dot_dimension_numbers<[1], [0], [0], [1], [0, 0, 1, 1], [], []>} : vector<16x128xbf16>, vector<128x128xbf16>, vector<16x128xf32> -> vector<16x128xf32>
    %cst_18 = arith.constant dense<0.000000e+00> : vector<128xf32>
    %40 = vector.multi_reduction <add>, %39, %cst_18 [0] : vector<16x128xf32> to vector<128xf32>
    %41 = vector.shape_cast %40 : vector<128xf32> to vector<1x128xf32>
    %cst_19 = arith.constant 1.250000e-01 : f32
    %42 = vector.broadcast %cst_19 : f32 to vector<1x128xf32>
    %43 = arith.mulf %41, %42 : vector<1x128xf32>
    %44 = vector.broadcast %43 : vector<1x128xf32> to vector<16x128xf32>
    %45 = arith.subf %39, %44 : vector<16x128xf32>
    %cst_20 = arith.constant 0.000000e+00 : f32
    %46 = vector.shape_cast %2 : vector<16x1xi1> to vector<16x1xi1>
    %47 = vector.broadcast %46 : vector<16x1xi1> to vector<16x128xi1>
    %48 = vector.broadcast %cst_20 : f32 to vector<16x128xf32>
    %49 = arith.select %47, %45, %48 : vector<16x128xi1>, vector<16x128xf32>
    %50 = arith.mulf %49, %49 : vector<16x128xf32>
    %cst_21 = arith.constant dense<0.000000e+00> : vector<128xf32>
    %51 = vector.multi_reduction <add>, %50, %cst_21 [0] : vector<16x128xf32> to vector<128xf32>
    %52 = vector.shape_cast %51 : vector<128xf32> to vector<1x128xf32>
    %cst_22 = arith.constant 1.250000e-01 : f32
    %53 = vector.broadcast %cst_22 : f32 to vector<1x128xf32>
    %54 = arith.mulf %52, %53 : vector<1x128xf32>
    %c0_23 = arith.constant 0 : index
    %c0_24 = arith.constant 0 : index
    %55 = vector.load %arg5[%c0_23, %c0_24] : memref<1x128xf32, #tpu.memory_space<vmem>>, vector<1x128xf32>
    %cst_25 = arith.constant 9.99999974E-6 : f32
    %56 = vector.broadcast %cst_25 : f32 to vector<1x128xf32>
    %57 = arith.addf %54, %56 : vector<1x128xf32>
    %58 = math.rsqrt %57 : vector<1x128xf32>
    %59 = arith.mulf %55, %58 : vector<1x128xf32>
    %60 = vector.broadcast %59 : vector<1x128xf32> to vector<16x128xf32>
    %61 = arith.mulf %45, %60 : vector<16x128xf32>
    %c0_26 = arith.constant 0 : index
    %c0_27 = arith.constant 0 : index
    %62 = vector.load %arg6[%c0_26, %c0_27] : memref<1x128xf32, #tpu.memory_space<vmem>>, vector<1x128xf32>
    %63 = vector.broadcast %62 : vector<1x128xf32> to vector<16x128xf32>
    %64 = arith.addf %61, %63 : vector<16x128xf32>
    %c0_28 = arith.constant 0 : index
    %c0_29 = arith.constant 0 : index
    %65 = vector.load %arg7[%c0_28, %c0_29] : memref<16x128xf32, #tpu.memory_space<vmem>>, vector<16x128xf32>
    tpu.vector_store %arg7[%c0_28, %c0_29], %64 {strides = array<i32>} : memref<16x128xf32, #tpu.memory_space<vmem>>, vector<16x128xf32>,
    return
  }
}

</mosaic_0001>

<llo_original>
// kernel: tpu_custom_call.1
$region0: #{tpu_custom_call.1}
  #allocation0 [shape = 'u32[]', space=smem, size = 0x4, offset = 0x4, fixed_abs, tag = 'smem constant byte address 0x4 - core index']
  #allocation1 [shape = 'u32[72,128]{1,0:T(1,128)}', space=vmem, size = 0x9000, scoped, tag = 'internal scratch']
  %s0 = inlined_call_operand.hbm [shape: bf16[16,128], index: 0, kind: input, shape index: {}]
  %s1 = inlined_call_operand.hbm [shape: bf16[128,128], index: 1, kind: input, shape index: {}]
  %s2 = inlined_call_operand.vmem [shape: f32[1,128], index: 2, kind: input, shape index: {}]
  %s3 = inlined_call_operand.vmem [shape: f32[1,128], index: 3, kind: input, shape index: {}]
  %s4 = inlined_call_operand.hbm [shape: bf16[128,128], index: 4, kind: input, shape index: {}]
  %s5 = inlined_call_operand.vmem [shape: f32[1,128], index: 5, kind: input, shape index: {}]
  %s6 = inlined_call_operand.vmem [shape: f32[1,128], index: 6, kind: input, shape index: {}]
  %s7 = inlined_call_operand.hbm [shape: f32[16,128], index: 7, kind: output, shape index: {}]
  %s8 = sld [smem:[#allocation0]]
  $region50: #{tpu_custom_call.1} parent=0
    _
  %s10 = ssub.s32 1, %s8
  %s11 = scalar_select 0, %s10, %s8
  $region1: #{tpu_custom_call.1} parent=0
    #allocation2 [shape = 'u8[4096]{0}', space=vmem, size = 0x1000, scoped, tag = 'input window, operand 0, single buffered']
    #allocation3 [shape = 's32[1]{0}', space=sflag, size = 0x4, scoped, tag = 'scoped memory for tpu_custom_call.1']
    #allocation4 [shape = 's32[1]{0}', space=sflag, size = 0x4, scoped, tag = 'scoped memory for tpu_custom_call.1']
    #allocation5 [shape = 'u8[32768]{0}', space=vmem, size = 0x8000, scoped, tag = 'input window, operand 1, single buffered']
    #allocation6 [shape = 's32[1]{0}', space=sflag, size = 0x4, scoped, tag = 'scoped memory for tpu_custom_call.1']
    #allocation7 [shape = 'u8[32768]{0}', space=vmem, size = 0x8000, scoped, tag = 'input window, operand 4, single buffered']
    #allocation8 [shape = 'u8[8192]{0}', space=vmem, size = 0x2000, scoped, tag = 'output window, operand 0, single buffered']
    %12 = vsyncpa [#allocation3], 0
    %13 = vsyncpa [#allocation6], 0
    %14 = vsyncpa [#allocation4], 0
    // Predicated region
    $region2: #{tpu_custom_call.1} parent=1 // pred_check
      _
    $region3: #{tpu_custom_call.1} parent=1 // pred_check_branch
      %16 = sbr.rel (0) target = $region5
    $region4: #{tpu_custom_call.1} parent=1 // pred_region
      %18 = vsyncadd [#allocation3], 0
      %s19 = sshll.u32 %s0, 4
      %s20 = int_to_ptr.hbm [resolvable:$true] %s19
      %s21 = sshll.u32 [#allocation2], 4
      %s22 = int_to_ptr.vmem [resolvable:$true] %s21
      %27 = dma.hbm_to_vmem [thread:$0]  %s20, 128, %s22, [#allocation3], 64, 64, 4
    $region5: #{tpu_custom_call.1} parent=1 // pred_fallthru
      _
    // Predicated region
    $region6: #{tpu_custom_call.1} parent=1 // pred_check
      _
    $region7: #{tpu_custom_call.1} parent=1 // pred_check_branch
      %29 = sbr.rel (0) target = $region9
    $region8: #{tpu_custom_call.1} parent=1 // pred_region
      %31 = vsyncadd [#allocation6], 0
      %s32 = sshll.u32 %s1, 4
      %s33 = int_to_ptr.hbm [resolvable:$true] %s32
      %s34 = sshll.u32 [#allocation5], 4
      %s35 = int_to_ptr.vmem [resolvable:$true] %s34
      %40 = dma.hbm_to_vmem [thread:$0]  %s33, 1024, %s35, [#allocation6], 64, 64, 4
    $region9: #{tpu_custom_call.1} parent=1 // pred_fallthru
      _
    // Predicated region
    $region10: #{tpu_custom_call.1} parent=1 // pred_check
      _
    $region11: #{tpu_custom_call.1} parent=1 // pred_check_branch
      %42 = sbr.rel (0) target = $region13
    $region12: #{tpu_custom_call.1} parent=1 // pred_region
      _
    $region13: #{tpu_custom_call.1} parent=1 // pred_fallthru
      _
    // Predicated region
    $region14: #{tpu_custom_call.1} parent=1 // pred_check
      _
    $region15: #{tpu_custom_call.1} parent=1 // pred_check_branch
      %44 = sbr.rel (0) target = $region17
    $region16: #{tpu_custom_call.1} parent=1 // pred_region
      _
    $region17: #{tpu_custom_call.1} parent=1 // pred_fallthru
      _
    // Predicated region
    $region18: #{tpu_custom_call.1} parent=1 // pred_check
      _
    $region19: #{tpu_custom_call.1} parent=1 // pred_check_branch
      %46 = sbr.rel (0) target = $region21
    $region20: #{tpu_custom_call.1} parent=1 // pred_region
      %48 = vsyncadd [#allocation6], 0
      %s49 = sshll.u32 %s4, 4
      %s50 = int_to_ptr.hbm [resolvable:$true] %s49
      %s51 = sshll.u32 [#allocation7], 4
      %s52 = int_to_ptr.vmem [resolvable:$true] %s51
      %57 = dma.hbm_to_vmem [thread:$0]  %s50, 1024, %s52, [#allocation6], 64, 64, 4
    $region21: #{tpu_custom_call.1} parent=1 // pred_fallthru
      _
    // Predicated region
    $region22: #{tpu_custom_call.1} parent=1 // pred_check
      _
    $region23: #{tpu_custom_call.1} parent=1 // pred_check_branch
      %59 = sbr.rel (0) target = $region25
    $region24: #{tpu_custom_call.1} parent=1 // pred_region
      _
    $region25: #{tpu_custom_call.1} parent=1 // pred_fallthru
      _
    // Predicated region
    $region26: #{tpu_custom_call.1} parent=1 // pred_check
      _
    $region27: #{tpu_custom_call.1} parent=1 // pred_check_branch
      %61 = sbr.rel (0) target = $region29
    $region28: #{tpu_custom_call.1} parent=1 // pred_region
      _
    $region29: #{tpu_custom_call.1} parent=1 // pred_fallthru
      _
    // Predicated region
    $region30: #{tpu_custom_call.1} parent=1 // pred_check
      _
    $region31: #{tpu_custom_call.1} parent=1 // pred_check_branch
      %63 = sbr.rel (0) target = $region33
    $region32: #{tpu_custom_call.1} parent=1 // pred_region
      %65 = dma.done [#allocation3], 128
    $region33: #{tpu_custom_call.1} parent=1 // pred_fallthru
      _
    // Predicated region
    $region34: #{tpu_custom_call.1} parent=1 // pred_check
      _
    $region35: #{tpu_custom_call.1} parent=1 // pred_check_branch
      %67 = sbr.rel (0) target = $region37
    $region36: #{tpu_custom_call.1} parent=1 // pred_region
      %69 = dma.done [#allocation6], 1024
    $region37: #{tpu_custom_call.1} parent=1 // pred_fallthru
      _
    // Predicated region
    $region38: #{tpu_custom_call.1} parent=1 // pred_check
      _
    $region39: #{tpu_custom_call.1} parent=1 // pred_check_branch
      %71 = sbr.rel (0) target = $region41
    $region40: #{tpu_custom_call.1} parent=1 // pred_region
      %73 = dma.done [#allocation6], 1024
    $region41: #{tpu_custom_call.1} parent=1 // pred_fallthru
      _
    %v74 = vlaneseq
    %v75 = vshrl.u32 %v74, 7
    %v76 = vadd.s32 %v75, 8
    %vm77 = vcmp.lt.s32.totalorder %v75, 8
    %vm78 = vcmp.lt.s32.totalorder %v76, 8
    %v79 = vld [vmem:[#allocation2] sm:$0xf]
    %v80 = vld [vmem:[#allocation2 + $0x4] sm:$0xf]
    %v81 = vld [vmem:[#allocation5] sm:$0xf]
    %v82 = vld [vmem:[#allocation5 + $0x4] sm:$0xf]
    %v83 = vld [vmem:[#allocation5 + $0x8] sm:$0xf]
    %v84 = vld [vmem:[#allocation5 + $0xc] sm:$0xf]
    %v85 = vld [vmem:[#allocation5 + $0x10] sm:$0xf]
    %v86 = vld [vmem:[#allocation5 + $0x14] sm:$0xf]
    %v87 = vld [vmem:[#allocation5 + $0x18] sm:$0xf]
    %v88 = vld [vmem:[#allocation5 + $0x1c] sm:$0xf]
    %v89 = vld [vmem:[#allocation5 + $0x20] sm:$0xf]
    %v90 = vld [vmem:[#allocation5 + $0x24] sm:$0xf]
    %v91 = vld [vmem:[#allocation5 + $0x28] sm:$0xf]
    %v92 = vld [vmem:[#allocation5 + $0x2c] sm:$0xf]
    %v93 = vld [vmem:[#allocation5 + $0x30] sm:$0xf]
    %v94 = vld [vmem:[#allocation5 + $0x34] sm:$0xf]
    %v95 = vld [vmem:[#allocation5 + $0x38] sm:$0xf]
    %v96 = vld [vmem:[#allocation5 + $0x3c] sm:$0xf]
    %v99 = vunpack.c.l.b16 %v79
    %v100 = vunpack.c.l.b16 %v80
    %v101 = vpack.c.b16 %v100, %v99
    %v119 = vunpack.c.l.b16 %v81
    %v120 = vunpack.c.l.b16 %v82
    %v121 = vunpack.c.l.b16 %v83
    %v122 = vunpack.c.l.b16 %v84
    %v123 = vunpack.c.l.b16 %v85
    %v124 = vunpack.c.l.b16 %v86
    %v125 = vunpack.c.l.b16 %v87
    %v126 = vunpack.c.l.b16 %v88
    %v127 = vunpack.c.l.b16 %v89
    %v128 = vunpack.c.l.b16 %v90
    %v129 = vunpack.c.l.b16 %v91
    %v130 = vunpack.c.l.b16 %v92
    %v131 = vunpack.c.l.b16 %v93
    %v132 = vunpack.c.l.b16 %v94
    %v133 = vunpack.c.l.b16 %v95
    %v134 = vunpack.c.l.b16 %v96
    %v135 = vpack.c.b16 %v120, %v119
    %v136 = vpack.c.b16 %v122, %v121
    %v137 = vpack.c.b16 %v124, %v123
    %v138 = vpack.c.b16 %v126, %v125
    %v139 = vpack.c.b16 %v128, %v127
    %v140 = vpack.c.b16 %v130, %v129
    %v141 = vpack.c.b16 %v132, %v131
    %v142 = vpack.c.b16 %v134, %v133
    %151 = vmatpush.bf16.msra.mxu0 %v142
    %152 = vmatpush.bf16.msra.mxu0 %v141
    %153 = vmatpush.bf16.msra.mxu0 %v140
    %154 = vmatpush.bf16.msra.mxu0 %v139
    %155 = vmatpush.bf16.msra.mxu0 %v138
    %156 = vmatpush.bf16.msra.mxu0 %v137
    %157 = vmatpush.bf16.msra.mxu0 %v136
    %158 = vmatpush.bf16.msra.mxu0 %v135
    %159 = vmatmul.bf16.gmra.mxu0 %v101
    %v160 = vpop.f32.mrf.mxu0
    %v161 = vadd.f32 0.0, %v160
    %v162 = vpop.f32.mrf.mxu0
    %v163 = vadd.f32 0.0, %v162
    %164 = vdwg.mxu0
    %v165 = vadd.f32 %v161, %v163
    %v166 = vrot.slane %v165, 4
    %v167 = vadd.f32 %v165, %v166
    %v168 = vrot.slane %v167, 2
    %v169 = vadd.f32 %v167, %v168
    %v170 = vrot.slane %v169, 1
    %v171 = vadd.f32 %v169, %v170
    %v172 = vmul.f32 %v171, 0.125
    %v173 = vsub.f32 %v161, %v172
    %v174 = vsub.f32 %v163, %v172
    %v175 = vsel %vm77, 1, 0
    %v176 = vsel %vm78, 1, 0
    %vm177 = vcmp.eq.s32.totalorder %v175, 1
    %vm178 = vcmp.eq.s32.totalorder %v176, 1
    %v179 = vsel %vm177, %v173, 0.0
    %v180 = vsel %vm178, %v174, 0.0
    %v181 = vmul.f32 %v179, %v179
    %v182 = vmul.f32 %v180, %v180
    %v183 = vadd.f32 %v181, %v182
    %v184 = vrot.slane %v183, 4
    %v185 = vadd.f32 %v183, %v184
    %v186 = vrot.slane %v185, 2
    %v187 = vadd.f32 %v185, %v186
    %v188 = vrot.slane %v187, 1
    %v189 = vadd.f32 %v187, %v188
    %v190 = vmul.f32 %v189, 0.125
    %v191 = vld [vmem:[%s2] sm:$0x1]
    %v192 = vadd.f32 %v190, 1e-05
    %v193 = vrsqrt.pop %v192
    %v194 = vmul.f32 %v193, %v192
    %v195 = vmul.f32 %v194, %v193
    %v196 = vmul.f32 0.5, %v195
    %v197 = vsub.f32 1.5, %v196
    %v198 = vmul.f32 %v193, %v197
    %vm199 = vweird.f32 %v192
    %vm200 = vweird.f32 %v193
    %vm201 = vmor %vm199, %vm200
    %v202 = vsel %vm201, %v193, %v198
    %v203 = vmul.f32 %v191, %v202
    %v205 = vperm.slane %v203, 0
    %v207 = vmul.f32 %v179, %v205
    %v208 = vmul.f32 %v180, %v205
    %v209 = vld [vmem:[%s3] sm:$0x1]
    %v211 = vperm.slane %v209, 0
    %v213 = vadd.f32 %v207, %v211
    %v214 = vadd.f32 %v208, %v211
    %v215 = vmax.f32 %v213, 0.0
    %v216 = vmax.f32 %v214, 0.0
    %v217 = vsel %vm177, %v215, 0.0
    %v218 = vsel %vm178, %v216, 0.0
    %v219 = vpack.c.bf16 %v218, %v217
    %v220 = vld [vmem:[#allocation7] sm:$0xf]
    %v221 = vld [vmem:[#allocation7 + $0x4] sm:$0xf]
    %v222 = vld [vmem:[#allocation7 + $0x8] sm:$0xf]
    %v223 = vld [vmem:[#allocation7 + $0xc] sm:$0xf]
    %v224 = vld [vmem:[#allocation7 + $0x10] sm:$0xf]
    %v225 = vld [vmem:[#allocation7 + $0x14] sm:$0xf]
    %v226 = vld [vmem:[#allocation7 + $0x18] sm:$0xf]
    %v227 = vld [vmem:[#allocation7 + $0x1c] sm:$0xf]
    %v228 = vld [vmem:[#allocation7 + $0x20] sm:$0xf]
    %v229 = vld [vmem:[#allocation7 + $0x24] sm:$0xf]
    %v230 = vld [vmem:[#allocation7 + $0x28] sm:$0xf]
    %v231 = vld [vmem:[#allocation7 + $0x2c] sm:$0xf]
    %v232 = vld [vmem:[#allocation7 + $0x30] sm:$0xf]
    %v233 = vld [vmem:[#allocation7 + $0x34] sm:$0xf]
    %v234 = vld [vmem:[#allocation7 + $0x38] sm:$0xf]
    %v235 = vld [vmem:[#allocation7 + $0x3c] sm:$0xf]
    %v252 = vunpack.c.l.b16 %v220
    %v253 = vunpack.c.l.b16 %v221
    %v254 = vunpack.c.l.b16 %v222
    %v255 = vunpack.c.l.b16 %v223
    %v256 = vunpack.c.l.b16 %v224
    %v257 = vunpack.c.l.b16 %v225
    %v258 = vunpack.c.l.b16 %v226
    %v259 = vunpack.c.l.b16 %v227
    %v260 = vunpack.c.l.b16 %v228
    %v261 = vunpack.c.l.b16 %v229
    %v262 = vunpack.c.l.b16 %v230
    %v263 = vunpack.c.l.b16 %v231
    %v264 = vunpack.c.l.b16 %v232
    %v265 = vunpack.c.l.b16 %v233
    %v266 = vunpack.c.l.b16 %v234
    %v267 = vunpack.c.l.b16 %v235
    %v268 = vpack.c.b16 %v253, %v252
    %v269 = vpack.c.b16 %v255, %v254
    %v270 = vpack.c.b16 %v257, %v256
    %v271 = vpack.c.b16 %v259, %v258
    %v272 = vpack.c.b16 %v261, %v260
    %v273 = vpack.c.b16 %v263, %v262
    %v274 = vpack.c.b16 %v265, %v264
    %v275 = vpack.c.b16 %v267, %v266
    %284 = vmatpush.bf16.msra.mxu0 %v275
    %285 = vmatpush.bf16.msra.mxu0 %v274
    %286 = vmatpush.bf16.msra.mxu0 %v273
    %287 = vmatpush.bf16.msra.mxu0 %v272
    %288 = vmatpush.bf16.msra.mxu0 %v271
    %289 = vmatpush.bf16.msra.mxu0 %v270
    %290 = vmatpush.bf16.msra.mxu0 %v269
    %291 = vmatpush.bf16.msra.mxu0 %v268
    %292 = vmatmul.bf16.gmra.mxu0 %v219
    %v293 = vpop.f32.mrf.mxu0
    %v294 = vadd.f32 0.0, %v293
    %v295 = vpop.f32.mrf.mxu0
    %v296 = vadd.f32 0.0, %v295
    %297 = vdwg.mxu0
    %v298 = vadd.f32 %v294, %v296
    %v299 = vrot.slane %v298, 4
    %v300 = vadd.f32 %v298, %v299
    %v301 = vrot.slane %v300, 2
    %v302 = vadd.f32 %v300, %v301
    %v303 = vrot.slane %v302, 1
    %v304 = vadd.f32 %v302, %v303
    %v305 = vmul.f32 %v304, 0.125
    %v306 = vsub.f32 %v294, %v305
    %v307 = vsub.f32 %v296, %v305
    %v308 = vsel %vm177, %v306, 0.0
    %v309 = vsel %vm178, %v307, 0.0
    %v310 = vmul.f32 %v308, %v308
    %v311 = vmul.f32 %v309, %v309
    %v312 = vadd.f32 %v310, %v311
    %v313 = vrot.slane %v312, 4
    %v314 = vadd.f32 %v312, %v313
    %v315 = vrot.slane %v314, 2
    %v316 = vadd.f32 %v314, %v315
    %v317 = vrot.slane %v316, 1
    %v318 = vadd.f32 %v316, %v317
    %v319 = vmul.f32 %v318, 0.125
    %v320 = vld [vmem:[%s5] sm:$0x1]
    %v321 = vadd.f32 %v319, 1e-05
    %v322 = vrsqrt.pop %v321
    %v323 = vmul.f32 %v322, %v321
    %v324 = vmul.f32 %v323, %v322
    %v325 = vmul.f32 0.5, %v324
    %v326 = vsub.f32 1.5, %v325
    %v327 = vmul.f32 %v322, %v326
    %vm328 = vweird.f32 %v321
    %vm329 = vweird.f32 %v322
    %vm330 = vmor %vm328, %vm329
    %v331 = vsel %vm330, %v322, %v327
    %v332 = vmul.f32 %v320, %v331
    %v334 = vperm.slane %v332, 0
    %v336 = vmul.f32 %v306, %v334
    %v337 = vmul.f32 %v307, %v334
    %v338 = vld [vmem:[%s6] sm:$0x1]
    %v340 = vperm.slane %v338, 0
    %v342 = vadd.f32 %v336, %v340
    %v343 = vadd.f32 %v337, %v340
    %344 = vst [vmem:[#allocation8] sm:$0xff] %v342
    %345 = vst [vmem:[#allocation8 + $0x8] sm:$0xff] %v343
    // Predicated region
    $region42: #{tpu_custom_call.1} parent=1 // pred_check
      _
    $region43: #{tpu_custom_call.1} parent=1 // pred_check_branch
      %347 = sbr.rel (0) target = $region45
    $region44: #{tpu_custom_call.1} parent=1 // pred_region
      %349 = vsyncadd [#allocation4], 0
      %s350 = sshll.u32 [#allocation8], 4
      %s351 = int_to_ptr.vmem [resolvable:$true] %s350
      %s352 = sshll.u32 %s7, 4
      %s353 = int_to_ptr.hbm [resolvable:$true] %s352
      %358 = dma.vmem_to_hbm [thread:$0]  %s351, 256, %s353, [#allocation4], 128, 128, 8
    $region45: #{tpu_custom_call.1} parent=1 // pred_fallthru
      _
    // Predicated region
    $region46: #{tpu_custom_call.1} parent=1 // pred_check
      _
    $region47: #{tpu_custom_call.1} parent=1 // pred_check_branch
      %360 = sbr.rel (0) target = $region49
    $region48: #{tpu_custom_call.1} parent=1 // pred_region
      %362 = dma.done [#allocation4], 256
    $region49: #{tpu_custom_call.1} parent=1 // pred_fallthru
      _
    %363 = vsyncpa [#allocation3], 1
    %364 = vsyncpa [#allocation6], 1
    %365 = vsyncpa [#allocation4], 1

</llo_original>
